<compile_context>
chip_gen: v7x
topology: tpu7x:2x2x1
jax: 0.10.0
libtpu: 0.0.40
codegen_flags: <defaults>
</compile_context>

<pallas_src>
import jax
import jax.numpy as jnp
from jax.experimental import pallas as pl
from jax.experimental.pallas import tpu as pltpu  # noqa: F401  (TPU backend)

# ---- synthetic "small" shapes consistent with the module ------------------
B = 2              # batch of frames
C = 3              # RGB channels
H = W = 16         # small stand-in for the 224x224 transform output
K = 3              # conv stem kernel size
HW = H * W
CKK = C * K * K    # 27 real patch features
CKK_PAD = 128      # lane-padded patch feature width (zeros beyond 27)
F = 32             # backbone feature width (stand-in for resnet18 features)
OUT_PAD = 128      # lane-padded output: lanes 0,1 = (pitch, yaw) rad, lane 2 = blink
EH = EW = 16       # synthetic eye-crop size (stand-in for 84x84 crops)
EHW = EH * EW

BLINK_THR = 0.15
SHIFT_R = 10.0

IMAGENET_MEAN = jnp.array([0.485, 0.456, 0.406], jnp.float32)
IMAGENET_STD = jnp.array([0.229, 0.224, 0.225], jnp.float32)


# ---------------------------------------------------------------------------
# Fused Pallas kernel (single block, no grid)
# ---------------------------------------------------------------------------
def gaze_blink_kernel(patch_ref, w1_ref, b1_ref, w2_ref, b2_ref,
                      eyes_ref, wb_ref, bb_ref, out_ref):
    """Single-block fused forward.

    patch_ref : (B*HW, CKK_PAD)   raw-pixel im2col patches (mean-padded borders,
                                  zero-padded feature lanes 27..127)
    w1, b1    : (CKK_PAD, F), (1, F)   conv stem as matmul, Normalize folded in
    w2, b2    : (F, OUT_PAD), (1, OUT_PAD)  lane-padded 2-way regression head
    eyes_ref  : (B, 2, C, EHW)    lane-major left/right eye crops
    wb, bb    : (1, 1, C), (1, 1) tiny blink head on per-eye GAP features
    out_ref   : (B, OUT_PAD)      lanes 0,1 = pitch/yaw (rad), lane 2 = blink score
    """
    # ---- gaze backbone: normalize(folded) -> conv stem (one MXU matmul)
    #      -> ReLU -> GAP per image -> FC head
    x = patch_ref[...]                                           # (B*HW, CKK_PAD)
    h = jnp.dot(x, w1_ref[...], preferred_element_type=jnp.float32)
    h = jnp.maximum(h + b1_ref[...], 0.0)                        # (B*HW, F)
    pooled = jnp.concatenate(
        [jnp.mean(h[i * HW:(i + 1) * HW], axis=0, keepdims=True)
         for i in range(B)],
        axis=0)                                                  # (B, F)
    head = jnp.dot(pooled, w2_ref[...],
                   preferred_element_type=jnp.float32) + b2_ref[...]  # (B, OUT_PAD)

    # ---- blink detector: per-eye GAP -> linear -> sigmoid -> mean over eyes
    # TODO(synk): the real blink detector is a VGG16 classifier; approximated
    # here by GAP + linear + sigmoid, keeping blink_mode='mean' semantics.
    feats = jnp.mean(eyes_ref[...], axis=-1)                     # (B, 2, C) lane reduce
    logits = jnp.sum(feats * wb_ref[...], axis=-1) + bb_ref[0, 0]   # (B, 2)
    probs = jax.nn.sigmoid(logits)
    score = jnp.mean(probs, axis=-1, keepdims=True)              # (B, 1)  blink_mode='mean'

    # ---- pack: head angles everywhere, blink score in lane 2
    lane = jax.lax.broadcasted_iota(jnp.int32, (B, OUT_PAD), 1)
    out_ref[...] = jnp.where(lane == 2, score, head)


def run_fused(patches, w1, b1, w2, b2, eyes, w_blink, b_blink):
    out = pl.pallas_call(
        gaze_blink_kernel,
        out_shape=jax.ShapeDtypeStruct((B, OUT_PAD), jnp.float32),
    )(patches, w1, b1, w2, b2, eyes, w_blink, b_blink)
    return out


# ---------------------------------------------------------------------------
# Glue: im2col (mean-padded borders), gaze geometry post-processing
# ---------------------------------------------------------------------------
def im2col_mean_pad(x_nhwc, k=K):
    """im2col for a 'same' 3x3 conv.

    The border is padded with the per-channel ImageNet MEAN so that, after the
    normalization fold inside w1/b1, padded taps contribute exactly 0 — exactly
    matching PyTorch's Normalize -> Conv2d(padding=1, zero pad) ordering.
    The feature axis is zero-padded 27 -> CKK_PAD for lane-dense loads.
    """
    b, h, w, c = x_nhwc.shape
    xp = jnp.broadcast_to(IMAGENET_MEAN, (b, h + 2, w + 2, c))
    xp = xp.at[:, 1:h + 1, 1:w + 1, :].set(x_nhwc)
    patches = [xp[:, dy:dy + h, dx:dx + w, :]
               for dy in range(k) for dx in range(k)]
    p = jnp.stack(patches, axis=3)                               # (B,H,W,K*K,C)
    p = p.reshape(b, h * w, k * k * c)                           # (B, HW, CKK)
    p = jnp.pad(p, ((0, 0), (0, 0), (0, CKK_PAD - k * k * c)))   # lane pad -> 128
    return p.reshape(b * h * w, CKK_PAD)                         # (B*HW, CKK_PAD)


def postprocess(angles, blink_score, head_euler_deg):
    """angle_to_vector -> denormalize -> vector_to_angle -> estimate_shift."""
    pitch_n, yaw_n = angles[:, 0], angles[:, 1]
    # angle_to_vector (ETH-XGaze face convention)
    gx = -jnp.cos(pitch_n) * jnp.sin(yaw_n)
    gy = -jnp.sin(pitch_n)
    gz = -jnp.cos(pitch_n) * jnp.cos(yaw_n)
    # denormalize_gaze_vector: identity normalizing rotation (synthetic camera)
    vec_pitch = jnp.rad2deg(jnp.arcsin(-gy))
    vec_yaw = jnp.rad2deg(jnp.arctan2(-gx, -gz))
    # head_euler_deg follows the 'XYZ' Euler order of the original solvePnP
    # head pose; columns 0/1 are consumed as (pitch, yaw) like the reference.
    face_pitch, face_yaw = head_euler_deg[:, 0], head_euler_deg[:, 1]
    pitch = vec_pitch + face_pitch
    yaw = vec_yaw - face_yaw
    # estimate_shift(mode='circle', r=10.0)
    is_shift = jnp.sqrt(pitch ** 2 + yaw ** 2) > SHIFT_R
    is_blink = blink_score < BLINK_THR
    # tag codes: 0 = center, 1 = shift, 2 = blink
    tag = jnp.where(is_blink, 2, jnp.where(is_shift, 1, 0)).astype(jnp.int32)
    nan = jnp.float32(jnp.nan)
    pitch = jnp.where(is_blink, nan, pitch)                      # pitch=None on blink
    yaw = jnp.where(is_blink, nan, yaw)
    return pitch, yaw, tag


# ---------------------------------------------------------------------------
# Deterministic parameter init (Normalize folded into the stem) + forward
# ---------------------------------------------------------------------------
def init_params():
    key = jax.random.PRNGKey(0)
    k1, k2, k3, k4 = jax.random.split(key, 4)
    # patch columns are tap-major / channel-minor -> tile the 3-vectors K*K times
    mean_cols = jnp.tile(IMAGENET_MEAN, K * K)                   # (CKK,)
    std_cols = jnp.tile(IMAGENET_STD, K * K)                     # (CKK,)
    w1_raw = 0.1 * jax.random.normal(k1, (CKK, F), jnp.float32)
    b1_raw = jnp.zeros((F,), jnp.float32)
    # Fold Normalize:  ((x - m)/s) @ W + b  ==  x @ (W/s) + (b - (m/s) @ W)
    w1_fold = w1_raw / std_cols[:, None]
    b1_fold = b1_raw - (mean_cols / std_cols) @ w1_raw
    w1 = jnp.zeros((CKK_PAD, F), jnp.float32).at[:CKK, :].set(w1_fold)
    b1 = b1_fold.reshape(1, F)
    w2_core = 0.1 * jax.random.normal(k2, (F, 2), jnp.float32)
    w2 = jnp.zeros((F, OUT_PAD), jnp.float32).at[:, :2].set(w2_core)
    b2 = jnp.zeros((1, OUT_PAD), jnp.float32)
    w_blink = 0.5 * jax.random.normal(k3, (1, 1, C), jnp.float32)
    b_blink = 0.1 * jax.random.normal(k4, (1, 1), jnp.float32)
    return dict(w1=w1, b1=b1, w2=w2, b2=b2,
                w_blink=w_blink, b_blink=b_blink)


@jax.jit
def gaze_runner_forward(image_nchw, eyes, head_euler_deg, params):
    # NCHW (PyTorch conv convention) -> NHWC, then im2col with mean-padded border.
    x_nhwc = jnp.transpose(image_nchw, (0, 2, 3, 1))
    patches = im2col_mean_pad(x_nhwc)                            # (B*HW, CKK_PAD)
    # Eye crops lane-major: (B, 2, Eh, Ew, C) -> (B, 2, C, EHW)
    eyes_lm = jnp.transpose(eyes, (0, 1, 4, 2, 3)).reshape(B, 2, C, EHW)
    out = run_fused(patches, params["w1"], params["b1"],
                    params["w2"], params["b2"],
                    eyes_lm, params["w_blink"], params["b_blink"])  # (B, OUT_PAD)
    angles = out[:, :2]                                          # (B, 2) radians
    blink_score = out[:, 2]                                      # (B,)
    return postprocess(angles, blink_score, head_euler_deg)


if __name__ == "__main__":
    key = jax.random.PRNGKey(0)
    k_img, k_eye, k_hp = jax.random.split(key, 3)
    image = jax.random.uniform(k_img, (B, C, H, W), jnp.float32)          # NCHW frame
    eyes = jax.random.uniform(k_eye, (B, 2, EH, EW, C), jnp.float32)      # eye crops
    head_euler = 5.0 * jax.random.normal(k_hp, (B, 3), jnp.float32)       # XYZ degrees

    params = init_params()
    pitch, yaw, tag = gaze_runner_forward(image, eyes, head_euler, params)
    jax.block_until_ready((pitch, yaw, tag))
    print("KERNEL_OK")
</pallas_src>

<mosaic_0001>
module attributes {stable_mosaic.version = 11 : i64} {
  func.func @gaze_blink_kernel(%arg0: memref<512x128xf32, #tpu.memory_space<vmem>>, %arg1: memref<128x32xf32, #tpu.memory_space<vmem>>, %arg2: memref<1x32xf32, #tpu.memory_space<vmem>>, %arg3: memref<32x128xf32, #tpu.memory_space<vmem>>, %arg4: memref<1x128xf32, #tpu.memory_space<vmem>>, %arg5: memref<2x2x3x256xf32, #tpu.memory_space<vmem>>, %arg6: memref<1x1x3xf32, #tpu.memory_space<vmem>>, %arg7: memref<1x1xf32, #tpu.memory_space<vmem>>, %arg8: memref<2x128xf32, #tpu.memory_space<vmem>>) attributes {dimension_semantics = [], scalar_prefetch = 0 : i64, scratch_operands = 0 : i64, tpu.core_type = #tpu.core_type<tc>} {
    %c0 = arith.constant 0 : index
    %c0_0 = arith.constant 0 : index
    %0 = vector.load %arg0[%c0, %c0_0] : memref<512x128xf32, #tpu.memory_space<vmem>>, vector<512x128xf32>
    %c0_1 = arith.constant 0 : index
    %c0_2 = arith.constant 0 : index
    %1 = vector.load %arg1[%c0_1, %c0_2] : memref<128x32xf32, #tpu.memory_space<vmem>>, vector<128x32xf32>
    %cst = arith.constant dense<0.000000e+00> : vector<512x32xf32>
    %2 = tpu.matmul %0, %1, %cst {dimension_numbers = #tpu.dot_dimension_numbers<[1], [0], [0], [1], [0, 0, 1, 1], [], []>} : vector<512x128xf32>, vector<128x32xf32>, vector<512x32xf32> -> vector<512x32xf32>
    %c0_3 = arith.constant 0 : index
    %c0_4 = arith.constant 0 : index
    %3 = vector.load %arg2[%c0_3, %c0_4] : memref<1x32xf32, #tpu.memory_space<vmem>>, vector<1x32xf32>
    %4 = vector.broadcast %3 : vector<1x32xf32> to vector<512x32xf32>
    %5 = arith.addf %2, %4 : vector<512x32xf32>
    %cst_5 = arith.constant 0.000000e+00 : f32
    %6 = vector.broadcast %cst_5 : f32 to vector<512x32xf32>
    %7 = arith.maximumf %5, %6 : vector<512x32xf32>
    %8 = vector.extract_strided_slice %7 {offsets = [0, 0], sizes = [256, 32], strides = [1, 1]} : vector<512x32xf32> to vector<256x32xf32>
    %cst_6 = arith.constant dense<0.000000e+00> : vector<32xf32>
    %9 = vector.multi_reduction <add>, %8, %cst_6 [0] : vector<256x32xf32> to vector<32xf32>
    %10 = vector.shape_cast %9 : vector<32xf32> to vector<1x32xf32>
    %cst_7 = arith.constant 2.560000e+02 : f32
    %11 = vector.broadcast %cst_7 : f32 to vector<1x32xf32>
    %12 = arith.divf %10, %11 : vector<1x32xf32>
    %13 = vector.extract_strided_slice %7 {offsets = [256, 0], sizes = [256, 32], strides = [1, 1]} : vector<512x32xf32> to vector<256x32xf32>
    %cst_8 = arith.constant dense<0.000000e+00> : vector<32xf32>
    %14 = vector.multi_reduction <add>, %13, %cst_8 [0] : vector<256x32xf32> to vector<32xf32>
    %15 = vector.shape_cast %14 : vector<32xf32> to vector<1x32xf32>
    %cst_9 = arith.constant 2.560000e+02 : f32
    %16 = vector.broadcast %cst_9 : f32 to vector<1x32xf32>
    %17 = arith.divf %15, %16 : vector<1x32xf32>
    %18 = tpu.concatenate %12, %17 in 0 : vector<1x32xf32>, vector<1x32xf32> -> vector<2x32xf32>
    %c0_10 = arith.constant 0 : index
    %c0_11 = arith.constant 0 : index
    %19 = vector.load %arg3[%c0_10, %c0_11] : memref<32x128xf32, #tpu.memory_space<vmem>>, vector<32x128xf32>
    %cst_12 = arith.constant dense<0.000000e+00> : vector<2x128xf32>
    %20 = tpu.matmul %18, %19, %cst_12 {dimension_numbers = #tpu.dot_dimension_numbers<[1], [0], [0], [1], [0, 0, 1, 1], [], []>} : vector<2x32xf32>, vector<32x128xf32>, vector<2x128xf32> -> vector<2x128xf32>
    %c0_13 = arith.constant 0 : index
    %c0_14 = arith.constant 0 : index
    %21 = vector.load %arg4[%c0_13, %c0_14] : memref<1x128xf32, #tpu.memory_space<vmem>>, vector<1x128xf32>
    %22 = vector.broadcast %21 : vector<1x128xf32> to vector<2x128xf32>
    %23 = arith.addf %20, %22 : vector<2x128xf32>
    %c0_15 = arith.constant 0 : index
    %c0_16 = arith.constant 0 : index
    %c0_17 = arith.constant 0 : index
    %c0_18 = arith.constant 0 : index
    %24 = vector.load %arg5[%c0_15, %c0_16, %c0_17, %c0_18] : memref<2x2x3x256xf32, #tpu.memory_space<vmem>>, vector<2x2x3x256xf32>
    %cst_19 = arith.constant dense<0.000000e+00> : vector<2x2x3xf32>
    %25 = vector.multi_reduction <add>, %24, %cst_19 [3] : vector<2x2x3x256xf32> to vector<2x2x3xf32>
    %cst_20 = arith.constant 2.560000e+02 : f32
    %26 = vector.broadcast %cst_20 : f32 to vector<2x2x3xf32>
    %27 = arith.divf %25, %26 : vector<2x2x3xf32>
    %c0_21 = arith.constant 0 : index
    %c0_22 = arith.constant 0 : index
    %c0_23 = arith.constant 0 : index
    %28 = vector.load %arg6[%c0_21, %c0_22, %c0_23] : memref<1x1x3xf32, #tpu.memory_space<vmem>>, vector<1x1x3xf32>
    %29 = vector.broadcast %28 : vector<1x1x3xf32> to vector<2x2x3xf32>
    %30 = arith.mulf %27, %29 : vector<2x2x3xf32>
    %cst_24 = arith.constant dense<0.000000e+00> : vector<2x2xf32>
    %31 = vector.multi_reduction <add>, %30, %cst_24 [2] : vector<2x2x3xf32> to vector<2x2xf32>
    %c0_25 = arith.constant 0 : index
    %c0_26 = arith.constant 0 : index
    %32 = vector.load %arg7[%c0_25, %c0_26] : memref<1x1xf32, #tpu.memory_space<vmem>>, vector<1x1xf32>
    %33 = vector.extract %32[0, 0] : f32 from vector<1x1xf32>
    %34 = vector.broadcast %33 : f32 to vector<2x2xf32>
    %35 = arith.addf %31, %34 : vector<2x2xf32>
    %36 = arith.negf %35 : vector<2x2xf32>
    %37 = math.exp %36 : vector<2x2xf32>
    %cst_27 = arith.constant 1.000000e+00 : f32
    %38 = vector.broadcast %cst_27 : f32 to vector<2x2xf32>
    %39 = arith.addf %38, %37 : vector<2x2xf32>
    %40 = arith.divf %38, %39 : vector<2x2xf32>
    %cst_28 = arith.constant dense<0.000000e+00> : vector<2xf32>
    %41 = vector.multi_reduction <add>, %40, %cst_28 [1] : vector<2x2xf32> to vector<2xf32>
    %42 = vector.shape_cast %41 : vector<2xf32> to vector<2x1xf32>
    %cst_29 = arith.constant 2.000000e+00 : f32
    %43 = vector.broadcast %cst_29 : f32 to vector<2x1xf32>
    %44 = arith.divf %42, %43 : vector<2x1xf32>
    %45 = tpu.iota {dimensions = array<i32: 1>} : vector<2x128xi32>
    %c2_i32 = arith.constant 2 : i32
    %46 = vector.broadcast %c2_i32 : i32 to vector<2x128xi32>
    %47 = arith.cmpi eq, %45, %46 : vector<2x128xi32>
    %48 = vector.shape_cast %44 : vector<2x1xf32> to vector<2x1xf32>
    %49 = vector.broadcast %48 : vector<2x1xf32> to vector<2x128xf32>
    %50 = arith.select %47, %49, %23 : vector<2x128xi1>, vector<2x128xf32>
    %c0_30 = arith.constant 0 : index
    %c0_31 = arith.constant 0 : index
    %51 = vector.load %arg8[%c0_30, %c0_31] : memref<2x128xf32, #tpu.memory_space<vmem>>, vector<2x128xf32>
    tpu.vector_store %arg8[%c0_30, %c0_31], %50 {strides = array<i32>} : memref<2x128xf32, #tpu.memory_space<vmem>>, vector<2x128xf32>,
    return
  }
}

</mosaic_0001>

<llo_original>
// kernel: gaze_runner_forward.1
$region0: #{gaze_runner_forward.1}
  #allocation0 [shape = 'u32[]', space=smem, size = 0x4, offset = 0x4, fixed_abs, tag = 'smem constant byte address 0x4 - core index']
  #allocation1 [shape = 'u32[144,128]{1,0:T(1,128)}', space=vmem, size = 0x12000, scoped, tag = 'internal scratch']
  #allocation2 [shape = 'f32[1,1]{1,0:T(1,128)S(1)}', space=vmem, size = 0x200, scoped, tag = 'scoped memory for gaze_runner_forward.1']
  %s0 = inlined_call_operand.vmem [shape: f32[512,128], index: 0, kind: input, shape index: {}]
  %s1 = inlined_call_operand.vmem [shape: f32[128,32], index: 1, kind: input, shape index: {}]
  %s2 = inlined_call_operand.vmem [shape: f32[1,32], index: 2, kind: input, shape index: {}]
  %s3 = inlined_call_operand.vmem [shape: f32[32,128], index: 3, kind: input, shape index: {}]
  %s4 = inlined_call_operand.vmem [shape: f32[1,128], index: 4, kind: input, shape index: {}]
  %s5 = inlined_call_operand.vmem [shape: f32[2,2,3,256], index: 5, kind: input, shape index: {}]
  %s6 = inlined_call_operand.vmem [shape: f32[1,1,3], index: 6, kind: input, shape index: {}]
  %s7 = inlined_call_operand.<no memory space> [shape: f32[1,1], index: 7, kind: input, shape index: {}]
  %s8 = inlined_call_operand.vmem [shape: f32[2,128], index: 8, kind: output, shape index: {}]
  %s9 = sld [smem:[#allocation0]]
  $region42: #{gaze_runner_forward.1} parent=0
    _
  %s11 = ssub.s32 1, %s9
  %s12 = scalar_select 0, %s11, %s9
  %v13 = vstv %s7
  %14 = vst [vmem:[#allocation2] sm:$0x1] %v13
  // Predicated region
  $region2: #{gaze_runner_forward.1} parent=0 // pred_check
    _
  $region3: #{gaze_runner_forward.1} parent=0 // pred_check_branch
    %16 = sbr.rel (0) target = $region5
  $region4: #{gaze_runner_forward.1} parent=0 // pred_region
    _
  $region5: #{gaze_runner_forward.1} parent=0 // pred_fallthru
    _
  // Predicated region
  $region6: #{gaze_runner_forward.1} parent=0 // pred_check
    _
  $region7: #{gaze_runner_forward.1} parent=0 // pred_check_branch
    %18 = sbr.rel (0) target = $region9
  $region8: #{gaze_runner_forward.1} parent=0 // pred_region
    _
  $region9: #{gaze_runner_forward.1} parent=0 // pred_fallthru
    _
  // Predicated region
  $region10: #{gaze_runner_forward.1} parent=0 // pred_check
    _
  $region11: #{gaze_runner_forward.1} parent=0 // pred_check_branch
    %20 = sbr.rel (0) target = $region13
  $region12: #{gaze_runner_forward.1} parent=0 // pred_region
    _
  $region13: #{gaze_runner_forward.1} parent=0 // pred_fallthru
    _
  // Predicated region
  $region14: #{gaze_runner_forward.1} parent=0 // pred_check
    _
  $region15: #{gaze_runner_forward.1} parent=0 // pred_check_branch
    %22 = sbr.rel (0) target = $region17
  $region16: #{gaze_runner_forward.1} parent=0 // pred_region
    _
  $region17: #{gaze_runner_forward.1} parent=0 // pred_fallthru
    _
  // Predicated region
  $region18: #{gaze_runner_forward.1} parent=0 // pred_check
    _
  $region19: #{gaze_runner_forward.1} parent=0 // pred_check_branch
    %24 = sbr.rel (0) target = $region21
  $region20: #{gaze_runner_forward.1} parent=0 // pred_region
    _
  $region21: #{gaze_runner_forward.1} parent=0 // pred_fallthru
    _
  // Predicated region
  $region22: #{gaze_runner_forward.1} parent=0 // pred_check
    _
  $region23: #{gaze_runner_forward.1} parent=0 // pred_check_branch
    %26 = sbr.rel (0) target = $region25
  $region24: #{gaze_runner_forward.1} parent=0 // pred_region
    _
  $region25: #{gaze_runner_forward.1} parent=0 // pred_fallthru
    _
  // Predicated region
  $region26: #{gaze_runner_forward.1} parent=0 // pred_check
    _
  $region27: #{gaze_runner_forward.1} parent=0 // pred_check_branch
    %28 = sbr.rel (0) target = $region29
  $region28: #{gaze_runner_forward.1} parent=0 // pred_region
    _
  $region29: #{gaze_runner_forward.1} parent=0 // pred_fallthru
    _
  // Predicated region
  $region30: #{gaze_runner_forward.1} parent=0 // pred_check
    _
  $region31: #{gaze_runner_forward.1} parent=0 // pred_check_branch
    %30 = sbr.rel (0) target = $region33
  $region32: #{gaze_runner_forward.1} parent=0 // pred_region
    _
  $region33: #{gaze_runner_forward.1} parent=0 // pred_fallthru
    _
  %v31 = vld [vmem:[%s0] sm:$0xff]
  %v32 = vld [vmem:[%s0 + $0x8] sm:$0xff]
  %v33 = vld [vmem:[%s0 + $0x10] sm:$0xff]
  %v34 = vld [vmem:[%s0 + $0x18] sm:$0xff]
  %v35 = vld [vmem:[%s0 + $0x20] sm:$0xff]
  %v36 = vld [vmem:[%s0 + $0x28] sm:$0xff]
  %v37 = vld [vmem:[%s0 + $0x30] sm:$0xff]
  %v38 = vld [vmem:[%s0 + $0x38] sm:$0xff]
  %v39 = vld [vmem:[%s0 + $0x40] sm:$0xff]
  %v40 = vld [vmem:[%s0 + $0x48] sm:$0xff]
  %v41 = vld [vmem:[%s0 + $0x50] sm:$0xff]
  %v42 = vld [vmem:[%s0 + $0x58] sm:$0xff]
  %v43 = vld [vmem:[%s0 + $0x60] sm:$0xff]
  %v44 = vld [vmem:[%s0 + $0x68] sm:$0xff]
  %v45 = vld [vmem:[%s0 + $0x70] sm:$0xff]
  %v46 = vld [vmem:[%s0 + $0x78] sm:$0xff]
  %v47 = vld [vmem:[%s0 + $0x80] sm:$0xff]
  %v48 = vld [vmem:[%s0 + $0x88] sm:$0xff]
  %v49 = vld [vmem:[%s0 + $0x90] sm:$0xff]
  %v50 = vld [vmem:[%s0 + $0x98] sm:$0xff]
  %v51 = vld [vmem:[%s0 + $0xa0] sm:$0xff]
  %v52 = vld [vmem:[%s0 + $0xa8] sm:$0xff]
  %v53 = vld [vmem:[%s0 + $0xb0] sm:$0xff]
  %v54 = vld [vmem:[%s0 + $0xb8] sm:$0xff]
  %v55 = vld [vmem:[%s0 + $0xc0] sm:$0xff]
  %v56 = vld [vmem:[%s0 + $0xc8] sm:$0xff]
  %v57 = vld [vmem:[%s0 + $0xd0] sm:$0xff]
  %v58 = vld [vmem:[%s0 + $0xd8] sm:$0xff]
  %v59 = vld [vmem:[%s0 + $0xe0] sm:$0xff]
  %v60 = vld [vmem:[%s0 + $0xe8] sm:$0xff]
  %v61 = vld [vmem:[%s0 + $0xf0] sm:$0xff]
  %v62 = vld [vmem:[%s0 + $0xf8] sm:$0xff]
  %v63 = vld [vmem:[%s0 + $0x100] sm:$0xff]
  %v64 = vld [vmem:[%s0 + $0x108] sm:$0xff]
  %v65 = vld [vmem:[%s0 + $0x110] sm:$0xff]
  %v66 = vld [vmem:[%s0 + $0x118] sm:$0xff]
  %v67 = vld [vmem:[%s0 + $0x120] sm:$0xff]
  %v68 = vld [vmem:[%s0 + $0x128] sm:$0xff]
  %v69 = vld [vmem:[%s0 + $0x130] sm:$0xff]
  %v70 = vld [vmem:[%s0 + $0x138] sm:$0xff]
  %v71 = vld [vmem:[%s0 + $0x140] sm:$0xff]
  %v72 = vld [vmem:[%s0 + $0x148] sm:$0xff]
  %v73 = vld [vmem:[%s0 + $0x150] sm:$0xff]
  %v74 = vld [vmem:[%s0 + $0x158] sm:$0xff]
  %v75 = vld [vmem:[%s0 + $0x160] sm:$0xff]
  %v76 = vld [vmem:[%s0 + $0x168] sm:$0xff]
  %v77 = vld [vmem:[%s0 + $0x170] sm:$0xff]
  %v78 = vld [vmem:[%s0 + $0x178] sm:$0xff]
  %v79 = vld [vmem:[%s0 + $0x180] sm:$0xff]
  %v80 = vld [vmem:[%s0 + $0x188] sm:$0xff]
  %v81 = vld [vmem:[%s0 + $0x190] sm:$0xff]
  %v82 = vld [vmem:[%s0 + $0x198] sm:$0xff]
  %v83 = vld [vmem:[%s0 + $0x1a0] sm:$0xff]
  %v84 = vld [vmem:[%s0 + $0x1a8] sm:$0xff]
  %v85 = vld [vmem:[%s0 + $0x1b0] sm:$0xff]
  %v86 = vld [vmem:[%s0 + $0x1b8] sm:$0xff]
  %v87 = vld [vmem:[%s0 + $0x1c0] sm:$0xff]
  %v88 = vld [vmem:[%s0 + $0x1c8] sm:$0xff]
  %v89 = vld [vmem:[%s0 + $0x1d0] sm:$0xff]
  %v90 = vld [vmem:[%s0 + $0x1d8] sm:$0xff]
  %v91 = vld [vmem:[%s0 + $0x1e0] sm:$0xff]
  %v92 = vld [vmem:[%s0 + $0x1e8] sm:$0xff]
  %v93 = vld [vmem:[%s0 + $0x1f0] sm:$0xff]
  %v94 = vld [vmem:[%s0 + $0x1f8] sm:$0xff]
  %v95 = vld [vmem:[%s1] sm:$0xff]
  %v96 = vld [vmem:[%s1 + $0x8] sm:$0xff]
  %v97 = vld [vmem:[%s1 + $0x10] sm:$0xff]
  %v98 = vld [vmem:[%s1 + $0x18] sm:$0xff]
  %v99 = vld [vmem:[%s1 + $0x20] sm:$0xff]
  %v100 = vld [vmem:[%s1 + $0x28] sm:$0xff]
  %v101 = vld [vmem:[%s1 + $0x30] sm:$0xff]
  %v102 = vld [vmem:[%s1 + $0x38] sm:$0xff]
  %v103 = vld [vmem:[%s1 + $0x40] sm:$0xff]
  %v104 = vld [vmem:[%s1 + $0x48] sm:$0xff]
  %v105 = vld [vmem:[%s1 + $0x50] sm:$0xff]
  %v106 = vld [vmem:[%s1 + $0x58] sm:$0xff]
  %v107 = vld [vmem:[%s1 + $0x60] sm:$0xff]
  %v108 = vld [vmem:[%s1 + $0x68] sm:$0xff]
  %v109 = vld [vmem:[%s1 + $0x70] sm:$0xff]
  %v110 = vld [vmem:[%s1 + $0x78] sm:$0xff]
  %v111 = vld [vmem:[%s2] sm:$0x1]
  %v113 = vlaneseq
  %v114 = vshrl.u32 %v113, 7
  %v115 = vsub.s32 0, %v114
  %v116 = vrot.slane %v111, %v115
  %118 = vmatprep.subr.mxu0 0.0
  %119 = vmatpush1.msra.mxu0 %v95
  %120 = vmatprep.subr.mxu0 0.0
  %121 = vmatpush1.msra.mxu0 %v96
  %122 = vmatprep.subr.mxu0 0.0
  %123 = vmatpush1.msra.mxu0 %v97
  %124 = vmatprep.subr.mxu0 0.0
  %125 = vmatpush1.msra.mxu0 %v98
  %126 = vmatprep.subr.mxu0 0.0
  %127 = vmatpush1.msra.mxu0 %v99
  %128 = vmatprep.subr.mxu0 0.0
  %129 = vmatpush1.msra.mxu0 %v100
  %130 = vmatprep.subr.mxu0 0.0
  %131 = vmatpush1.msra.mxu0 %v101
  %132 = vmatprep.subr.mxu0 0.0
  %133 = vmatpush1.msra.mxu0 %v102
  %134 = vmatprep.subr.mxu0 0.0
  %135 = vmatpush1.msra.mxu0 %v103
  %136 = vmatprep.subr.mxu0 0.0
  %137 = vmatpush1.msra.mxu0 %v104
  %138 = vmatprep.subr.mxu0 0.0
  %139 = vmatpush1.msra.mxu0 %v105
  %140 = vmatprep.subr.mxu0 0.0
  %141 = vmatpush1.msra.mxu0 %v106
  %142 = vmatprep.subr.mxu0 0.0
  %143 = vmatpush1.msra.mxu0 %v107
  %144 = vmatprep.subr.mxu0 0.0
  %145 = vmatpush1.msra.mxu0 %v108
  %146 = vmatprep.subr.mxu0 0.0
  %147 = vmatpush1.msra.mxu0 %v109
  %148 = vmatprep.subr.mxu0 0.0
  %149 = vmatpush1.msra.mxu0 %v110
  %150 = vmatprep.subr.mxu0 0.0
  %151 = vmatpush1.msra.mxu0 0.0
  %152 = vmatprep.subr.mxu0 0.0
  %153 = vmatpush1.msra.mxu0 0.0
  %154 = vmatprep.subr.mxu0 0.0
  %155 = vmatpush1.msra.mxu0 0.0
  %156 = vmatprep.subr.mxu0 0.0
  %157 = vmatpush1.msra.mxu0 0.0
  %158 = vmatprep.subr.mxu0 0.0
  %159 = vmatpush1.msra.mxu0 0.0
  %160 = vmatprep.subr.mxu0 0.0
  %161 = vmatpush1.msra.mxu0 0.0
  %162 = vmatprep.subr.mxu0 0.0
  %163 = vmatpush1.msra.mxu0 0.0
  %164 = vmatprep.subr.mxu0 0.0
  %165 = vmatpush1.msra.mxu0 0.0
  %166 = vmatprep.subr.mxu0 0.0
  %167 = vmatpush1.msra.mxu0 0.0
  %168 = vmatprep.subr.mxu0 0.0
  %169 = vmatpush1.msra.mxu0 0.0
  %170 = vmatprep.subr.mxu0 0.0
  %171 = vmatpush1.msra.mxu0 0.0
  %172 = vmatprep.subr.mxu0 0.0
  %173 = vmatpush1.msra.mxu0 0.0
  %174 = vmatprep.subr.mxu0 0.0
  %175 = vmatpush1.msra.mxu0 0.0
  %176 = vmatprep.subr.mxu0 0.0
  %177 = vmatpush1.msra.mxu0 0.0
  %178 = vmatprep.subr.mxu0 0.0
  %179 = vmatpush1.msra.mxu0 0.0
  %180 = vmatprep.subr.mxu0 0.0
  %181 = vmatpush1.msra.mxu0 0.0
  %182 = vmatprep.mubr.f32.mxu0 0.0
  %183 = vmatmul.mubr.f32.gmra.mrb[0].mxu0 %v31
  %v184 = vpop.f32.mrb[0].mxu0
  %v185 = vadd.f32 %v116, %v184
  %v186 = vpop.f32.mrb[0].mxu0
  %187 = vmatprep.mubr.f32.mxu0 0.0
  %188 = vmatmul.mubr.f32.gmra.mrb[0].mxu0 %v32
  %v189 = vpop.f32.mrb[0].mxu0
  %v190 = vadd.f32 %v116, %v189
  %v191 = vpop.f32.mrb[0].mxu0
  %192 = vmatprep.mubr.f32.mxu0 0.0
  %193 = vmatmul.mubr.f32.gmra.mrb[0].mxu0 %v33
  %v194 = vpop.f32.mrb[0].mxu0
  %v195 = vadd.f32 %v116, %v194
  %v196 = vpop.f32.mrb[0].mxu0
  %197 = vmatprep.mubr.f32.mxu0 0.0
  %198 = vmatmul.mubr.f32.gmra.mrb[0].mxu0 %v34
  %v199 = vpop.f32.mrb[0].mxu0
  %v200 = vadd.f32 %v116, %v199
  %v201 = vpop.f32.mrb[0].mxu0
  %202 = vmatprep.mubr.f32.mxu0 0.0
  %203 = vmatmul.mubr.f32.gmra.mrb[0].mxu0 %v35
  %v204 = vpop.f32.mrb[0].mxu0
  %v205 = vadd.f32 %v116, %v204
  %v206 = vpop.f32.mrb[0].mxu0
  %207 = vmatprep.mubr.f32.mxu0 0.0
  %208 = vmatmul.mubr.f32.gmra.mrb[0].mxu0 %v36
  %v209 = vpop.f32.mrb[0].mxu0
  %v210 = vadd.f32 %v116, %v209
  %v211 = vpop.f32.mrb[0].mxu0
  %212 = vmatprep.mubr.f32.mxu0 0.0
  %213 = vmatmul.mubr.f32.gmra.mrb[0].mxu0 %v37
  %v214 = vpop.f32.mrb[0].mxu0
  %v215 = vadd.f32 %v116, %v214
  %v216 = vpop.f32.mrb[0].mxu0
  %217 = vmatprep.mubr.f32.mxu0 0.0
  %218 = vmatmul.mubr.f32.gmra.mrb[0].mxu0 %v38
  %v219 = vpop.f32.mrb[0].mxu0
  %v220 = vadd.f32 %v116, %v219
  %v221 = vpop.f32.mrb[0].mxu0
  %222 = vmatprep.mubr.f32.mxu0 0.0
  %223 = vmatmul.mubr.f32.gmra.mrb[0].mxu0 %v39
  %v224 = vpop.f32.mrb[0].mxu0
  %v225 = vadd.f32 %v116, %v224
  %v226 = vpop.f32.mrb[0].mxu0
  %227 = vmatprep.mubr.f32.mxu0 0.0
  %228 = vmatmul.mubr.f32.gmra.mrb[0].mxu0 %v40
  %v229 = vpop.f32.mrb[0].mxu0
  %v230 = vadd.f32 %v116, %v229
  %v231 = vpop.f32.mrb[0].mxu0
  %232 = vmatprep.mubr.f32.mxu0 0.0
  %233 = vmatmul.mubr.f32.gmra.mrb[0].mxu0 %v41
  %v234 = vpop.f32.mrb[0].mxu0
  %v235 = vadd.f32 %v116, %v234
  %v236 = vpop.f32.mrb[0].mxu0
  %237 = vmatprep.mubr.f32.mxu0 0.0
  %238 = vmatmul.mubr.f32.gmra.mrb[0].mxu0 %v42
  %v239 = vpop.f32.mrb[0].mxu0
  %v240 = vadd.f32 %v116, %v239
  %v241 = vpop.f32.mrb[0].mxu0
  %242 = vmatprep.mubr.f32.mxu0 0.0
  %243 = vmatmul.mubr.f32.gmra.mrb[0].mxu0 %v43
  %v244 = vpop.f32.mrb[0].mxu0
  %v245 = vadd.f32 %v116, %v244
  %v246 = vpop.f32.mrb[0].mxu0
  %247 = vmatprep.mubr.f32.mxu0 0.0
  %248 = vmatmul.mubr.f32.gmra.mrb[0].mxu0 %v44
  %v249 = vpop.f32.mrb[0].mxu0
  %v250 = vadd.f32 %v116, %v249
  %v251 = vpop.f32.mrb[0].mxu0
  %252 = vmatprep.mubr.f32.mxu0 0.0
  %253 = vmatmul.mubr.f32.gmra.mrb[0].mxu0 %v45
  %v254 = vpop.f32.mrb[0].mxu0
  %v255 = vadd.f32 %v116, %v254
  %v256 = vpop.f32.mrb[0].mxu0
  %257 = vmatprep.mubr.f32.mxu0 0.0
  %258 = vmatmul.mubr.f32.gmra.mrb[0].mxu0 %v46
  %v259 = vpop.f32.mrb[0].mxu0
  %v260 = vadd.f32 %v116, %v259
  %v261 = vpop.f32.mrb[0].mxu0
  %262 = vmatprep.mubr.f32.mxu0 0.0
  %263 = vmatmul.mubr.f32.gmra.mrb[0].mxu0 %v47
  %v264 = vpop.f32.mrb[0].mxu0
  %v265 = vadd.f32 %v116, %v264
  %v266 = vpop.f32.mrb[0].mxu0
  %267 = vmatprep.mubr.f32.mxu0 0.0
  %268 = vmatmul.mubr.f32.gmra.mrb[0].mxu0 %v48
  %v269 = vpop.f32.mrb[0].mxu0
  %v270 = vadd.f32 %v116, %v269
  %v271 = vpop.f32.mrb[0].mxu0
  %272 = vmatprep.mubr.f32.mxu0 0.0
  %273 = vmatmul.mubr.f32.gmra.mrb[0].mxu0 %v49
  %v274 = vpop.f32.mrb[0].mxu0
  %v275 = vadd.f32 %v116, %v274
  %v276 = vpop.f32.mrb[0].mxu0
  %277 = vmatprep.mubr.f32.mxu0 0.0
  %278 = vmatmul.mubr.f32.gmra.mrb[0].mxu0 %v50
  %v279 = vpop.f32.mrb[0].mxu0
  %v280 = vadd.f32 %v116, %v279
  %v281 = vpop.f32.mrb[0].mxu0
  %282 = vmatprep.mubr.f32.mxu0 0.0
  %283 = vmatmul.mubr.f32.gmra.mrb[0].mxu0 %v51
  %v284 = vpop.f32.mrb[0].mxu0
  %v285 = vadd.f32 %v116, %v284
  %v286 = vpop.f32.mrb[0].mxu0
  %287 = vmatprep.mubr.f32.mxu0 0.0
  %288 = vmatmul.mubr.f32.gmra.mrb[0].mxu0 %v52
  %v289 = vpop.f32.mrb[0].mxu0
  %v290 = vadd.f32 %v116, %v289
  %v291 = vpop.f32.mrb[0].mxu0
  %292 = vmatprep.mubr.f32.mxu0 0.0
  %293 = vmatmul.mubr.f32.gmra.mrb[0].mxu0 %v53
  %v294 = vpop.f32.mrb[0].mxu0
  %v295 = vadd.f32 %v116, %v294
  %v296 = vpop.f32.mrb[0].mxu0
  %297 = vmatprep.mubr.f32.mxu0 0.0
  %298 = vmatmul.mubr.f32.gmra.mrb[0].mxu0 %v54
  %v299 = vpop.f32.mrb[0].mxu0
  %v300 = vadd.f32 %v116, %v299
  %v301 = vpop.f32.mrb[0].mxu0
  %302 = vmatprep.mubr.f32.mxu0 0.0
  %303 = vmatmul.mubr.f32.gmra.mrb[0].mxu0 %v55
  %v304 = vpop.f32.mrb[0].mxu0
  %v305 = vadd.f32 %v116, %v304
  %v306 = vpop.f32.mrb[0].mxu0
  %307 = vmatprep.mubr.f32.mxu0 0.0
  %308 = vmatmul.mubr.f32.gmra.mrb[0].mxu0 %v56
  %v309 = vpop.f32.mrb[0].mxu0
  %v310 = vadd.f32 %v116, %v309
  %v311 = vpop.f32.mrb[0].mxu0
  %312 = vmatprep.mubr.f32.mxu0 0.0
  %313 = vmatmul.mubr.f32.gmra.mrb[0].mxu0 %v57
  %v314 = vpop.f32.mrb[0].mxu0
  %v315 = vadd.f32 %v116, %v314
  %v316 = vpop.f32.mrb[0].mxu0
  %317 = vmatprep.mubr.f32.mxu0 0.0
  %318 = vmatmul.mubr.f32.gmra.mrb[0].mxu0 %v58
  %v319 = vpop.f32.mrb[0].mxu0
  %v320 = vadd.f32 %v116, %v319
  %v321 = vpop.f32.mrb[0].mxu0
  %322 = vmatprep.mubr.f32.mxu0 0.0
  %323 = vmatmul.mubr.f32.gmra.mrb[0].mxu0 %v59
  %v324 = vpop.f32.mrb[0].mxu0
  %v325 = vadd.f32 %v116, %v324
  %v326 = vpop.f32.mrb[0].mxu0
  %327 = vmatprep.mubr.f32.mxu0 0.0
  %328 = vmatmul.mubr.f32.gmra.mrb[0].mxu0 %v60
  %v329 = vpop.f32.mrb[0].mxu0
  %v330 = vadd.f32 %v116, %v329
  %v331 = vpop.f32.mrb[0].mxu0
  %332 = vmatprep.mubr.f32.mxu0 0.0
  %333 = vmatmul.mubr.f32.gmra.mrb[0].mxu0 %v61
  %v334 = vpop.f32.mrb[0].mxu0
  %v335 = vadd.f32 %v116, %v334
  %v336 = vpop.f32.mrb[0].mxu0
  %337 = vmatprep.mubr.f32.mxu0 0.0
  %338 = vmatmul.mubr.f32.gmra.mrb[0].mxu0 %v62
  %v339 = vpop.f32.mrb[0].mxu0
  %v340 = vadd.f32 %v116, %v339
  %v341 = vpop.f32.mrb[0].mxu0
  %342 = vmatprep.mubr.f32.mxu0 0.0
  %343 = vmatmul.mubr.f32.gmra.mrb[0].mxu0 %v63
  %v344 = vpop.f32.mrb[0].mxu0
  %v345 = vadd.f32 %v116, %v344
  %v346 = vpop.f32.mrb[0].mxu0
  %347 = vmatprep.mubr.f32.mxu0 0.0
  %348 = vmatmul.mubr.f32.gmra.mrb[0].mxu0 %v64
  %v349 = vpop.f32.mrb[0].mxu0
  %v350 = vadd.f32 %v116, %v349
  %v351 = vpop.f32.mrb[0].mxu0
  %352 = vmatprep.mubr.f32.mxu0 0.0
  %353 = vmatmul.mubr.f32.gmra.mrb[0].mxu0 %v65
  %v354 = vpop.f32.mrb[0].mxu0
  %v355 = vadd.f32 %v116, %v354
  %v356 = vpop.f32.mrb[0].mxu0
  %357 = vmatprep.mubr.f32.mxu0 0.0
  %358 = vmatmul.mubr.f32.gmra.mrb[0].mxu0 %v66
  %v359 = vpop.f32.mrb[0].mxu0
  %v360 = vadd.f32 %v116, %v359
  %v361 = vpop.f32.mrb[0].mxu0
  %362 = vmatprep.mubr.f32.mxu0 0.0
  %363 = vmatmul.mubr.f32.gmra.mrb[0].mxu0 %v67
  %v364 = vpop.f32.mrb[0].mxu0
  %v365 = vadd.f32 %v116, %v364
  %v366 = vpop.f32.mrb[0].mxu0
  %367 = vmatprep.mubr.f32.mxu0 0.0
  %368 = vmatmul.mubr.f32.gmra.mrb[0].mxu0 %v68
  %v369 = vpop.f32.mrb[0].mxu0
  %v370 = vadd.f32 %v116, %v369
  %v371 = vpop.f32.mrb[0].mxu0
  %372 = vmatprep.mubr.f32.mxu0 0.0
  %373 = vmatmul.mubr.f32.gmra.mrb[0].mxu0 %v69
  %v374 = vpop.f32.mrb[0].mxu0
  %v375 = vadd.f32 %v116, %v374
  %v376 = vpop.f32.mrb[0].mxu0
  %377 = vmatprep.mubr.f32.mxu0 0.0
  %378 = vmatmul.mubr.f32.gmra.mrb[0].mxu0 %v70
  %v379 = vpop.f32.mrb[0].mxu0
  %v380 = vadd.f32 %v116, %v379
  %v381 = vpop.f32.mrb[0].mxu0
  %382 = vmatprep.mubr.f32.mxu0 0.0
  %383 = vmatmul.mubr.f32.gmra.mrb[0].mxu0 %v71
  %v384 = vpop.f32.mrb[0].mxu0
  %v385 = vadd.f32 %v116, %v384
  %v386 = vpop.f32.mrb[0].mxu0
  %387 = vmatprep.mubr.f32.mxu0 0.0
  %388 = vmatmul.mubr.f32.gmra.mrb[0].mxu0 %v72
  %v389 = vpop.f32.mrb[0].mxu0
  %v390 = vadd.f32 %v116, %v389
  %v391 = vpop.f32.mrb[0].mxu0
  %392 = vmatprep.mubr.f32.mxu0 0.0
  %393 = vmatmul.mubr.f32.gmra.mrb[0].mxu0 %v73
  %v394 = vpop.f32.mrb[0].mxu0
  %v395 = vadd.f32 %v116, %v394
  %v396 = vpop.f32.mrb[0].mxu0
  %397 = vmatprep.mubr.f32.mxu0 0.0
  %398 = vmatmul.mubr.f32.gmra.mrb[0].mxu0 %v74
  %v399 = vpop.f32.mrb[0].mxu0
  %v400 = vadd.f32 %v116, %v399
  %v401 = vpop.f32.mrb[0].mxu0
  %402 = vmatprep.mubr.f32.mxu0 0.0
  %403 = vmatmul.mubr.f32.gmra.mrb[0].mxu0 %v75
  %v404 = vpop.f32.mrb[0].mxu0
  %v405 = vadd.f32 %v116, %v404
  %v406 = vpop.f32.mrb[0].mxu0
  %407 = vmatprep.mubr.f32.mxu0 0.0
  %408 = vmatmul.mubr.f32.gmra.mrb[0].mxu0 %v76
  %v409 = vpop.f32.mrb[0].mxu0
  %v410 = vadd.f32 %v116, %v409
  %v411 = vpop.f32.mrb[0].mxu0
  %412 = vmatprep.mubr.f32.mxu0 0.0
  %413 = vmatmul.mubr.f32.gmra.mrb[0].mxu0 %v77
  %v414 = vpop.f32.mrb[0].mxu0
  %v415 = vadd.f32 %v116, %v414
  %v416 = vpop.f32.mrb[0].mxu0
  %417 = vmatprep.mubr.f32.mxu0 0.0
  %418 = vmatmul.mubr.f32.gmra.mrb[0].mxu0 %v78
  %v419 = vpop.f32.mrb[0].mxu0
  %v420 = vadd.f32 %v116, %v419
  %v421 = vpop.f32.mrb[0].mxu0
  %422 = vmatprep.mubr.f32.mxu0 0.0
  %423 = vmatmul.mubr.f32.gmra.mrb[0].mxu0 %v79
  %v424 = vpop.f32.mrb[0].mxu0
  %v425 = vadd.f32 %v116, %v424
  %v426 = vpop.f32.mrb[0].mxu0
  %427 = vmatprep.mubr.f32.mxu0 0.0
  %428 = vmatmul.mubr.f32.gmra.mrb[0].mxu0 %v80
  %v429 = vpop.f32.mrb[0].mxu0
  %v430 = vadd.f32 %v116, %v429
  %v431 = vpop.f32.mrb[0].mxu0
  %432 = vmatprep.mubr.f32.mxu0 0.0
  %433 = vmatmul.mubr.f32.gmra.mrb[0].mxu0 %v81
  %v434 = vpop.f32.mrb[0].mxu0
  %v435 = vadd.f32 %v116, %v434
  %v436 = vpop.f32.mrb[0].mxu0
  %437 = vmatprep.mubr.f32.mxu0 0.0
  %438 = vmatmul.mubr.f32.gmra.mrb[0].mxu0 %v82
  %v439 = vpop.f32.mrb[0].mxu0
  %v440 = vadd.f32 %v116, %v439
  %v441 = vpop.f32.mrb[0].mxu0
  %442 = vmatprep.mubr.f32.mxu0 0.0
  %443 = vmatmul.mubr.f32.gmra.mrb[0].mxu0 %v83
  %v444 = vpop.f32.mrb[0].mxu0
  %v445 = vadd.f32 %v116, %v444
  %v446 = vpop.f32.mrb[0].mxu0
  %447 = vmatprep.mubr.f32.mxu0 0.0
  %448 = vmatmul.mubr.f32.gmra.mrb[0].mxu0 %v84
  %v449 = vpop.f32.mrb[0].mxu0
  %v450 = vadd.f32 %v116, %v449
  %v451 = vpop.f32.mrb[0].mxu0
  %452 = vmatprep.mubr.f32.mxu0 0.0
  %453 = vmatmul.mubr.f32.gmra.mrb[0].mxu0 %v85
  %v454 = vpop.f32.mrb[0].mxu0
  %v455 = vadd.f32 %v116, %v454
  %v456 = vpop.f32.mrb[0].mxu0
  %457 = vmatprep.mubr.f32.mxu0 0.0
  %458 = vmatmul.mubr.f32.gmra.mrb[0].mxu0 %v86
  %v459 = vpop.f32.mrb[0].mxu0
  %v460 = vadd.f32 %v116, %v459
  %v461 = vpop.f32.mrb[0].mxu0
  %462 = vmatprep.mubr.f32.mxu0 0.0
  %463 = vmatmul.mubr.f32.gmra.mrb[0].mxu0 %v87
  %v464 = vpop.f32.mrb[0].mxu0
  %v465 = vadd.f32 %v116, %v464
  %v466 = vpop.f32.mrb[0].mxu0
  %467 = vmatprep.mubr.f32.mxu0 0.0
  %468 = vmatmul.mubr.f32.gmra.mrb[0].mxu0 %v88
  %v469 = vpop.f32.mrb[0].mxu0
  %v470 = vadd.f32 %v116, %v469
  %v471 = vpop.f32.mrb[0].mxu0
  %472 = vmatprep.mubr.f32.mxu0 0.0
  %473 = vmatmul.mubr.f32.gmra.mrb[0].mxu0 %v89
  %v474 = vpop.f32.mrb[0].mxu0
  %v475 = vadd.f32 %v116, %v474
  %v476 = vpop.f32.mrb[0].mxu0
  %477 = vmatprep.mubr.f32.mxu0 0.0
  %478 = vmatmul.mubr.f32.gmra.mrb[0].mxu0 %v90
  %v479 = vpop.f32.mrb[0].mxu0
  %v480 = vadd.f32 %v116, %v479
  %v481 = vpop.f32.mrb[0].mxu0
  %482 = vmatprep.mubr.f32.mxu0 0.0
  %483 = vmatmul.mubr.f32.gmra.mrb[0].mxu0 %v91
  %v484 = vpop.f32.mrb[0].mxu0
  %v485 = vadd.f32 %v116, %v484
  %v486 = vpop.f32.mrb[0].mxu0
  %487 = vmatprep.mubr.f32.mxu0 0.0
  %488 = vmatmul.mubr.f32.gmra.mrb[0].mxu0 %v92
  %v489 = vpop.f32.mrb[0].mxu0
  %v490 = vadd.f32 %v116, %v489
  %v491 = vpop.f32.mrb[0].mxu0
  %492 = vmatprep.mubr.f32.mxu0 0.0
  %493 = vmatmul.mubr.f32.gmra.mrb[0].mxu0 %v93
  %v494 = vpop.f32.mrb[0].mxu0
  %v495 = vadd.f32 %v116, %v494
  %v496 = vpop.f32.mrb[0].mxu0
  %497 = vmatprep.mubr.f32.mxu0 0.0
  %498 = vmatmul.mubr.f32.gmra.mrb[0].mxu0 %v94
  %v499 = vpop.f32.mrb[0].mxu0
  %v500 = vadd.f32 %v116, %v499
  %v501 = vpop.f32.mrb[0].mxu0
  %502 = vdwg.mxu0
  %v503 = vmax.f32 %v185, 0.0
  %v504 = vmax.f32 %v190, 0.0
  %v505 = vmax.f32 %v195, 0.0
  %v506 = vmax.f32 %v200, 0.0
  %v507 = vmax.f32 %v205, 0.0
  %v508 = vmax.f32 %v210, 0.0
  %v509 = vmax.f32 %v215, 0.0
  %v510 = vmax.f32 %v220, 0.0
  %v511 = vmax.f32 %v225, 0.0
  %v512 = vmax.f32 %v230, 0.0
  %v513 = vmax.f32 %v235, 0.0
  %v514 = vmax.f32 %v240, 0.0
  %v515 = vmax.f32 %v245, 0.0
  %v516 = vmax.f32 %v250, 0.0
  %v517 = vmax.f32 %v255, 0.0
  %v518 = vmax.f32 %v260, 0.0
  %v519 = vmax.f32 %v265, 0.0
  %v520 = vmax.f32 %v270, 0.0
  %v521 = vmax.f32 %v275, 0.0
  %v522 = vmax.f32 %v280, 0.0
  %v523 = vmax.f32 %v285, 0.0
  %v524 = vmax.f32 %v290, 0.0
  %v525 = vmax.f32 %v295, 0.0
  %v526 = vmax.f32 %v300, 0.0
  %v527 = vmax.f32 %v305, 0.0
  %v528 = vmax.f32 %v310, 0.0
  %v529 = vmax.f32 %v315, 0.0
  %v530 = vmax.f32 %v320, 0.0
  %v531 = vmax.f32 %v325, 0.0
  %v532 = vmax.f32 %v330, 0.0
  %v533 = vmax.f32 %v335, 0.0
  %v534 = vmax.f32 %v340, 0.0
  %v535 = vmax.f32 %v345, 0.0
  %v536 = vmax.f32 %v350, 0.0
  %v537 = vmax.f32 %v355, 0.0
  %v538 = vmax.f32 %v360, 0.0
  %v539 = vmax.f32 %v365, 0.0
  %v540 = vmax.f32 %v370, 0.0
  %v541 = vmax.f32 %v375, 0.0
  %v542 = vmax.f32 %v380, 0.0
  %v543 = vmax.f32 %v385, 0.0
  %v544 = vmax.f32 %v390, 0.0
  %v545 = vmax.f32 %v395, 0.0
  %v546 = vmax.f32 %v400, 0.0
  %v547 = vmax.f32 %v405, 0.0
  %v548 = vmax.f32 %v410, 0.0
  %v549 = vmax.f32 %v415, 0.0
  %v550 = vmax.f32 %v420, 0.0
  %v551 = vmax.f32 %v425, 0.0
  %v552 = vmax.f32 %v430, 0.0
  %v553 = vmax.f32 %v435, 0.0
  %v554 = vmax.f32 %v440, 0.0
  %v555 = vmax.f32 %v445, 0.0
  %v556 = vmax.f32 %v450, 0.0
  %v557 = vmax.f32 %v455, 0.0
  %v558 = vmax.f32 %v460, 0.0
  %v559 = vmax.f32 %v465, 0.0
  %v560 = vmax.f32 %v470, 0.0
  %v561 = vmax.f32 %v475, 0.0
  %v562 = vmax.f32 %v480, 0.0
  %v563 = vmax.f32 %v485, 0.0
  %v564 = vmax.f32 %v490, 0.0
  %v565 = vmax.f32 %v495, 0.0
  %v566 = vmax.f32 %v500, 0.0
  %vm567 = vcmask 261120
  %v568 = vsel %vm567, %v503, 0.0
  %v569 = vsel %vm567, %v504, 0.0
  %v570 = vadd.f32 %v568, %v569
  %v571 = vsel %vm567, %v505, 0.0
  %v572 = vadd.f32 %v570, %v571
  %v573 = vsel %vm567, %v506, 0.0
  %v574 = vadd.f32 %v572, %v573
  %v575 = vsel %vm567, %v507, 0.0
  %v576 = vadd.f32 %v574, %v575
  %v577 = vsel %vm567, %v508, 0.0
  %v578 = vadd.f32 %v576, %v577
  %v579 = vsel %vm567, %v509, 0.0
  %v580 = vadd.f32 %v578, %v579
  %v581 = vsel %vm567, %v510, 0.0
  %v582 = vadd.f32 %v580, %v581
  %v583 = vsel %vm567, %v511, 0.0
  %v584 = vadd.f32 %v582, %v583
  %v585 = vsel %vm567, %v512, 0.0
  %v586 = vadd.f32 %v584, %v585
  %v587 = vsel %vm567, %v513, 0.0
  %v588 = vadd.f32 %v586, %v587
  %v589 = vsel %vm567, %v514, 0.0
  %v590 = vadd.f32 %v588, %v589
  %v591 = vsel %vm567, %v515, 0.0
  %v592 = vadd.f32 %v590, %v591
  %v593 = vsel %vm567, %v516, 0.0
  %v594 = vadd.f32 %v592, %v593
  %v595 = vsel %vm567, %v517, 0.0
  %v596 = vadd.f32 %v594, %v595
  %v597 = vsel %vm567, %v518, 0.0
  %v598 = vadd.f32 %v596, %v597
  %v599 = vsel %vm567, %v519, 0.0
  %v600 = vadd.f32 %v598, %v599
  %v601 = vsel %vm567, %v520, 0.0
  %v602 = vadd.f32 %v600, %v601
  %v603 = vsel %vm567, %v521, 0.0
  %v604 = vadd.f32 %v602, %v603
  %v605 = vsel %vm567, %v522, 0.0
  %v606 = vadd.f32 %v604, %v605
  %v607 = vsel %vm567, %v523, 0.0
  %v608 = vadd.f32 %v606, %v607
  %v609 = vsel %vm567, %v524, 0.0
  %v610 = vadd.f32 %v608, %v609
  %v611 = vsel %vm567, %v525, 0.0
  %v612 = vadd.f32 %v610, %v611
  %v613 = vsel %vm567, %v526, 0.0
  %v614 = vadd.f32 %v612, %v613
  %v615 = vsel %vm567, %v527, 0.0
  %v616 = vadd.f32 %v614, %v615
  %v617 = vsel %vm567, %v528, 0.0
  %v618 = vadd.f32 %v616, %v617
  %v619 = vsel %vm567, %v529, 0.0
  %v620 = vadd.f32 %v618, %v619
  %v621 = vsel %vm567, %v530, 0.0
  %v622 = vadd.f32 %v620, %v621
  %v623 = vsel %vm567, %v531, 0.0
  %v624 = vadd.f32 %v622, %v623
  %v625 = vsel %vm567, %v532, 0.0
  %v626 = vadd.f32 %v624, %v625
  %v627 = vsel %vm567, %v533, 0.0
  %v628 = vadd.f32 %v626, %v627
  %v629 = vsel %vm567, %v534, 0.0
  %v630 = vadd.f32 %v628, %v629
  %v631 = vrot.slane %v630, 4
  %v632 = vadd.f32 %v630, %v631
  %v633 = vrot.slane %v632, 2
  %v634 = vadd.f32 %v632, %v633
  %v635 = vrot.slane %v634, 1
  %v636 = vadd.f32 %v634, %v635
  %v637 = vrcp.pop 256.0
  %v638 = vmul.f32 %v636, %v637
  %v639 = vsel %vm567, %v535, 0.0
  %v640 = vsel %vm567, %v536, 0.0
  %v641 = vadd.f32 %v639, %v640
  %v642 = vsel %vm567, %v537, 0.0
  %v643 = vadd.f32 %v641, %v642
  %v644 = vsel %vm567, %v538, 0.0
  %v645 = vadd.f32 %v643, %v644
  %v646 = vsel %vm567, %v539, 0.0
  %v647 = vadd.f32 %v645, %v646
  %v648 = vsel %vm567, %v540, 0.0
  %v649 = vadd.f32 %v647, %v648
  %v650 = vsel %vm567, %v541, 0.0
  %v651 = vadd.f32 %v649, %v650
  %v652 = vsel %vm567, %v542, 0.0
  %v653 = vadd.f32 %v651, %v652
  %v654 = vsel %vm567, %v543, 0.0
  %v655 = vadd.f32 %v653, %v654
  %v656 = vsel %vm567, %v544, 0.0
  %v657 = vadd.f32 %v655, %v656
  %v658 = vsel %vm567, %v545, 0.0
  %v659 = vadd.f32 %v657, %v658
  %v660 = vsel %vm567, %v546, 0.0
  %v661 = vadd.f32 %v659, %v660
  %v662 = vsel %vm567, %v547, 0.0
  %v663 = vadd.f32 %v661, %v662
  %v664 = vsel %vm567, %v548, 0.0
  %v665 = vadd.f32 %v663, %v664
  %v666 = vsel %vm567, %v549, 0.0
  %v667 = vadd.f32 %v665, %v666
  %v668 = vsel %vm567, %v550, 0.0
  %v669 = vadd.f32 %v667, %v668
  %v670 = vsel %vm567, %v551, 0.0
  %v671 = vadd.f32 %v669, %v670
  %v672 = vsel %vm567, %v552, 0.0
  %v673 = vadd.f32 %v671, %v672
  %v674 = vsel %vm567, %v553, 0.0
  %v675 = vadd.f32 %v673, %v674
  %v676 = vsel %vm567, %v554, 0.0
  %v677 = vadd.f32 %v675, %v676
  %v678 = vsel %vm567, %v555, 0.0
  %v679 = vadd.f32 %v677, %v678
  %v680 = vsel %vm567, %v556, 0.0
  %v681 = vadd.f32 %v679, %v680
  %v682 = vsel %vm567, %v557, 0.0
  %v683 = vadd.f32 %v681, %v682
  %v684 = vsel %vm567, %v558, 0.0
  %v685 = vadd.f32 %v683, %v684
  %v686 = vsel %vm567, %v559, 0.0
  %v687 = vadd.f32 %v685, %v686
  %v688 = vsel %vm567, %v560, 0.0
  %v689 = vadd.f32 %v687, %v688
  %v690 = vsel %vm567, %v561, 0.0
  %v691 = vadd.f32 %v689, %v690
  %v692 = vsel %vm567, %v562, 0.0
  %v693 = vadd.f32 %v691, %v692
  %v694 = vsel %vm567, %v563, 0.0
  %v695 = vadd.f32 %v693, %v694
  %v696 = vsel %vm567, %v564, 0.0
  %v697 = vadd.f32 %v695, %v696
  %v698 = vsel %vm567, %v565, 0.0
  %v699 = vadd.f32 %v697, %v698
  %v700 = vsel %vm567, %v566, 0.0
  %v701 = vadd.f32 %v699, %v700
  %v702 = vrot.slane %v701, 4
  %v703 = vadd.f32 %v701, %v702
  %v704 = vrot.slane %v703, 2
  %v705 = vadd.f32 %v703, %v704
  %v706 = vrot.slane %v705, 1
  %v707 = vadd.f32 %v705, %v706
  %v708 = vmul.f32 %v707, %v637
  %vm709 = vcmask 1040384
  %v710 = vsel %vm709, %v638, %v708
  %v711 = vld [vmem:[%s3] sm:$0xff]
  %v712 = vld [vmem:[%s3 + $0x8] sm:$0xff]
  %v713 = vld [vmem:[%s3 + $0x10] sm:$0xff]
  %v714 = vld [vmem:[%s3 + $0x18] sm:$0xff]
  %v715 = vld [vmem:[%s4] sm:$0x1]
  %v717 = vlaneseq
  %v718 = vshrl.u32 %v717, 7
  %v719 = vsub.s32 0, %v718
  %v720 = vrot.slane %v715, %v719
  %v723 = vsel %vm567, %v710, 0
  %725 = vmatprep.subr.mxu0 0.0
  %726 = vmatpush1.msra.mxu0 %v711
  %727 = vmatprep.subr.mxu0 0.0
  %728 = vmatpush1.msra.mxu0 %v712
  %729 = vmatprep.subr.mxu0 0.0
  %730 = vmatpush1.msra.mxu0 %v713
  %731 = vmatprep.subr.mxu0 0.0
  %732 = vmatpush1.msra.mxu0 %v714
  %733 = vmatprep.subr.mxu0 0.0
  %734 = vmatpush1.msra.mxu0 0.0
  %735 = vmatprep.subr.mxu0 0.0
  %736 = vmatpush1.msra.mxu0 0.0
  %737 = vmatprep.subr.mxu0 0.0
  %738 = vmatpush1.msra.mxu0 0.0
  %739 = vmatprep.subr.mxu0 0.0
  %740 = vmatpush1.msra.mxu0 0.0
  %741 = vmatprep.subr.mxu0 0.0
  %742 = vmatpush1.msra.mxu0 0.0
  %743 = vmatprep.subr.mxu0 0.0
  %744 = vmatpush1.msra.mxu0 0.0
  %745 = vmatprep.subr.mxu0 0.0
  %746 = vmatpush1.msra.mxu0 0.0
  %747 = vmatprep.subr.mxu0 0.0
  %748 = vmatpush1.msra.mxu0 0.0
  %749 = vmatprep.subr.mxu0 0.0
  %750 = vmatpush1.msra.mxu0 0.0
  %751 = vmatprep.subr.mxu0 0.0
  %752 = vmatpush1.msra.mxu0 0.0
  %753 = vmatprep.subr.mxu0 0.0
  %754 = vmatpush1.msra.mxu0 0.0
  %755 = vmatprep.subr.mxu0 0.0
  %756 = vmatpush1.msra.mxu0 0.0
  %757 = vmatprep.subr.mxu0 0.0
  %758 = vmatpush1.msra.mxu0 0.0
  %759 = vmatprep.subr.mxu0 0.0
  %760 = vmatpush1.msra.mxu0 0.0
  %761 = vmatprep.subr.mxu0 0.0
  %762 = vmatpush1.msra.mxu0 0.0
  %763 = vmatprep.subr.mxu0 0.0
  %764 = vmatpush1.msra.mxu0 0.0
  %765 = vmatprep.subr.mxu0 0.0
  %766 = vmatpush1.msra.mxu0 0.0
  %767 = vmatprep.subr.mxu0 0.0
  %768 = vmatpush1.msra.mxu0 0.0
  %769 = vmatprep.subr.mxu0 0.0
  %770 = vmatpush1.msra.mxu0 0.0
  %771 = vmatprep.subr.mxu0 0.0
  %772 = vmatpush1.msra.mxu0 0.0
  %773 = vmatprep.subr.mxu0 0.0
  %774 = vmatpush1.msra.mxu0 0.0
  %775 = vmatprep.subr.mxu0 0.0
  %776 = vmatpush1.msra.mxu0 0.0
  %777 = vmatprep.subr.mxu0 0.0
  %778 = vmatpush1.msra.mxu0 0.0
  %779 = vmatprep.subr.mxu0 0.0
  %780 = vmatpush1.msra.mxu0 0.0
  %781 = vmatprep.subr.mxu0 0.0
  %782 = vmatpush1.msra.mxu0 0.0
  %783 = vmatprep.subr.mxu0 0.0
  %784 = vmatpush1.msra.mxu0 0.0
  %785 = vmatprep.subr.mxu0 0.0
  %786 = vmatpush1.msra.mxu0 0.0
  %787 = vmatprep.subr.mxu0 0.0
  %788 = vmatpush1.msra.mxu0 0.0
  %789 = vmatprep.mubr.f32.mxu0 0.0
  %790 = vmatmul.mubr.f32.gmra.mrb[0].mxu0 %v723
  %v791 = vpop.f32.mrb[0].mxu0
  %v792 = vadd.f32 %v720, %v791
  %v793 = vpop.f32.mrb[0].mxu0
  %794 = vdwg.mxu0
  %v795 = vld [vmem:[%s5] sm:$0x77]
  %v796 = vld [vmem:[%s5 + $0x8] sm:$0x77]
  %v797 = vld [vmem:[%s5 + $0x10] sm:$0x77]
  %v798 = vld [vmem:[%s5 + $0x18] sm:$0x77]
  %v803 = vcombine.high %v795, %v795
  %v804 = vcombine.high %v796, %v796
  %v805 = vcombine.high %v797, %v797
  %v806 = vcombine.high %v798, %v798
  %vm811 = vcmask 1042432
  %v812 = vsel %vm811, %v795, 0.0
  %v813 = vsel %vm811, %v803, 0.0
  %v814 = vadd.f32 %v812, %v813
  %815 = vadd.xlane.f32.xlu0 %v814
  %v816 = vpop.xlane.xlu0 %815
  %v817 = vsel %vm811, %v796, 0.0
  %v818 = vsel %vm811, %v804, 0.0
  %v819 = vadd.f32 %v817, %v818
  %820 = vadd.xlane.f32.xlu0 %v819
  %v821 = vpop.xlane.xlu0 %820
  %v822 = vsel %vm811, %v797, 0.0
  %v823 = vsel %vm811, %v805, 0.0
  %v824 = vadd.f32 %v822, %v823
  %825 = vadd.xlane.f32.xlu0 %v824
  %v826 = vpop.xlane.xlu0 %825
  %v827 = vsel %vm811, %v798, 0.0
  %v828 = vsel %vm811, %v806, 0.0
  %v829 = vadd.f32 %v827, %v828
  %830 = vadd.xlane.f32.xlu0 %v829
  %v831 = vpop.xlane.xlu0 %830
  %v832 = vmul.f32 %v816, %v637
  %v833 = vmul.f32 %v821, %v637
  %v834 = vmul.f32 %v826, %v637
  %v835 = vmul.f32 %v831, %v637
  %v836 = vld [vmem:[%s6] sm:$0x1]
  %v838 = vlaneseq
  %v839 = vshrl.u32 %v838, 7
  %v840 = vsub.s32 0, %v839
  %v841 = vrot.slane %v836, %v840
  %843 = vbcast.lane.b32.xlu0 %v841, 256
  %v844 = vpop.permute.xlu0 %843
  %v846 = vmul.f32 %v832, %v844
  %v847 = vmul.f32 %v833, %v844
  %v848 = vmul.f32 %v834, %v844
  %v849 = vmul.f32 %v835, %v844
  %854 = vset.pattern.permute.xlu0 0
  %855 = vperm.xlu0 %854, %v846
  %v856 = vpop.permute.xlu0 %855
  %857 = vset.pattern.permute.xlu0 0
  %858 = vperm.xlu0 %857, %v847
  %v859 = vpop.permute.xlu0 %858
  %860 = vset.pattern.permute.xlu0 0
  %861 = vperm.xlu0 %860, %v848
  %v862 = vpop.permute.xlu0 %861
  %863 = vset.pattern.permute.xlu0 0
  %864 = vperm.xlu0 %863, %v849
  %v865 = vpop.permute.xlu0 %864
  %v866 = vlaneseq
  %v867 = vand.u32 %v866, 127
  %v868 = vlaneseq
  %v869 = vshrl.u32 %v868, 7
  %v870 = vsub.s32 %v867, %v869
  %v871 = vrot.slane %v856, %v870
  %v872 = vlaneseq
  %v873 = vshrl.u32 %v872, 7
  %v874 = vsub.s32 %v867, %v873
  %v875 = vrot.slane %v859, %v874
  %v876 = vlaneseq
  %v877 = vshrl.u32 %v876, 7
  %v878 = vsub.s32 %v867, %v877
  %v879 = vrot.slane %v862, %v878
  %v880 = vlaneseq
  %v881 = vshrl.u32 %v880, 7
  %v882 = vsub.s32 %v867, %v881
  %v883 = vrot.slane %v865, %v882
  %vm884 = vcmask 1041409
  %v885 = vsel %vm884, %v875, %v871
  %v886 = vsel %vm884, %v883, %v879
  %vm889 = vcmask 17408
  %v890 = vsel %vm889, %v885, 0.0
  %891 = vadd.xlane.f32.xlu0 %v890
  %v892 = vpop.xlane.xlu0 %891
  %v893 = vsel %vm889, %v886, 0.0
  %894 = vadd.xlane.f32.xlu0 %v893
  %v895 = vpop.xlane.xlu0 %894
  %v896 = vld [vmem:[#allocation2] sm:$0x1]
  %s897 = vtos %v896
  %v898 = vstv %s897
  %v899 = vadd.f32 %v892, %v898
  %v900 = vadd.f32 %v895, %v898
  %v901 = vxor.u32 %v899, 2147483648
  %v902 = vxor.u32 %v900, 2147483648
  %v903 = vmul.f32 %v901, 1.442695
  %v904 = vpow.pop %v903
  %v905 = vmul.f32 %v902, 1.442695
  %v906 = vpow.pop %v905
  %v907 = vadd.f32 %v904, 1.0
  %v908 = vadd.f32 %v906, 1.0
  %v909 = vrcp.pop %v907
  %v910 = vmul.f32 1.0, %v909
  %v911 = vrcp.pop %v908
  %v912 = vmul.f32 1.0, %v911
  %v915 = vlaneseq
  %v916 = vshrl.u32 %v915, 7
  %v917 = vsub.s32 %v867, %v916
  %v918 = vrot.slane %v910, %v917
  %v919 = vlaneseq
  %v920 = vshrl.u32 %v919, 7
  %v921 = vsub.s32 %v867, %v920
  %v922 = vrot.slane %v912, %v921
  %v923 = vsel %vm884, %v922, %v918
  %vm925 = vcmask 9216
  %v926 = vsel %vm925, %v923, 0.0
  %927 = vadd.xlane.f32.xlu0 %v926
  %v928 = vpop.xlane.xlu0 %927
  %v929 = vrcp.pop 2.0
  %v930 = vmul.f32 %v928, %v929
  %vm931 = vcmp.eq.s32.totalorder %v867, 2
  %v932 = vsel %vm931, %v930, %v792
  %933 = vst [vmem:[%s8] sm:$0x3] %v932
  // Predicated region
  $region34: #{gaze_runner_forward.1} parent=0 // pred_check
    _
  $region35: #{gaze_runner_forward.1} parent=0 // pred_check_branch
    %935 = sbr.rel (0) target = $region37
  $region36: #{gaze_runner_forward.1} parent=0 // pred_region
    _
  $region37: #{gaze_runner_forward.1} parent=0 // pred_fallthru
    _
  // Predicated region
  $region38: #{gaze_runner_forward.1} parent=0 // pred_check
    _
  $region39: #{gaze_runner_forward.1} parent=0 // pred_check_branch
    %937 = sbr.rel (0) target = $region41
  $region40: #{gaze_runner_forward.1} parent=0 // pred_region
    _
  $region41: #{gaze_runner_forward.1} parent=0 // pred_fallthru
    _

</llo_original>
